<compile_context>
chip_gen: v7x
topology: tpu7x:2x2x1
jax: 0.10.0
libtpu: 0.0.40
codegen_flags: <defaults>
</compile_context>

<pallas_src>
import math

import jax
import jax.numpy as jnp
from jax.experimental import pallas as pl
from jax.experimental.pallas import tpu as pltpu

_INV_SQRT2 = 0.7071067811865476


def _ffn_kernel(x_ref, w1_ref, b1_ref, w2_ref, b2_ref, o_ref, *acc_scratch):
    """One (token-tile, F-tile) grid step.

    x_ref:  (TM, Hp)   token tile (resident across the F axis), compute dtype
    w1_ref: (Hp, TF)   F-slice of linear1 weight, compute dtype
    b1_ref: (1,  TF)   F-slice of linear1 bias
    w2_ref: (TF, Hp)   F-slice of linear2 weight, compute dtype
    b2_ref: (1,  Hp)   linear2 bias (invariant, tiny)
    o_ref:  (TM, Hp)   output tile (resident across the F axis)
    acc_scratch: optional f32 VMEM accumulator; if absent, o_ref (f32) is the accumulator.
    """
    acc_ref = acc_scratch[0] if acc_scratch else o_ref
    fk = pl.program_id(1)

    @pl.when(fk == 0)
    def _init():
        acc_ref[...] = jnp.zeros_like(acc_ref)

    # (TM, TF) slice of the intermediate activation; f32 accumulation on the MXU.
    h = jnp.dot(x_ref[...], w1_ref[...], preferred_element_type=jnp.float32)
    h = h + b1_ref[...].astype(jnp.float32)
    # Exact (erf-based) GELU in f32 -- matches torch.nn.GELU() default.
    h = 0.5 * h * (1.0 + jax.lax.erf(h * _INV_SQRT2))
    # TODO(synk): nn.Dropout is identity in eval mode; training-mode dropout
    # (pltpu.prng_seed / prng_random_bits masking) is not implemented.
    acc_ref[...] += jnp.dot(h.astype(w2_ref.dtype), w2_ref[...],
                            preferred_element_type=jnp.float32)

    @pl.when(fk == pl.num_programs(1) - 1)
    def _finalize():
        o_ref[...] = (acc_ref[...] + b2_ref[...].astype(jnp.float32)).astype(o_ref.dtype)


def _round_up(n, m):
    return ((n + m - 1) // m) * m


def _cdiv(a, b):
    return (a + b - 1) // b


def _pad2(a, rows, cols):
    pr, pc = rows - a.shape[0], cols - a.shape[1]
    if pr == 0 and pc == 0:
        return a
    return jnp.pad(a, ((0, pr), (0, pc)))


def _chip_config():
    """Per-generation tiling/VMEM budgets (conservative fallback = v6e-like)."""
    try:
        kind = jax.devices()[0].device_kind.lower()
    except Exception:  # pragma: no cover - defensive
        kind = ""
    if "v5 lite" in kind or "v5e" in kind or "v5litepod" in kind:
        cfg = dict(tile_m=256, max_tile_f=1024, min_tile_f=128,
                   vmem_budget=100 << 20, resident_budget=40 << 20, cores=1)
    elif "v7" in kind:
        # 64 MiB VMEM per TensorCore, 2 TCs/chip.
        cfg = dict(tile_m=512, max_tile_f=512, min_tile_f=256,
                   vmem_budget=56 << 20, resident_budget=24 << 20, cores=2)
    else:  # v6e / default (128 MiB VMEM)
        cfg = dict(tile_m=512, max_tile_f=2048, min_tile_f=256,
                   vmem_budget=100 << 20, resident_budget=40 << 20, cores=1)
    try:
        cap = int(pltpu.get_tpu_info().vmem_capacity_bytes)
        cfg["vmem_budget"] = min(cfg["vmem_budget"], int(cap * 0.85))
        cfg["resident_budget"] = min(cfg["resident_budget"], int(cap * 0.4))
    except Exception:  # pragma: no cover - defensive
        pass
    return cfg


def _est_vmem(tm, tf, hp, cd_bytes, out_bytes, use_scratch):
    """Live-VMEM estimate for a (tm, tf) tile config (double-buffered pipeline)."""
    est = 2 * tm * hp * cd_bytes           # x tile
    est += 2 * tm * hp * out_bytes         # output tile
    est += 2 * hp * tf * cd_bytes          # w1 F-slice
    est += 2 * tf * hp * cd_bytes          # w2 F-slice
    est += 2 * 8 * (tf + hp) * 4           # biases (padded to 8 sublanes)
    if use_scratch:
        est += tm * hp * 4                 # f32 accumulator scratch
    est += 2 * tm * tf * 4                 # intermediate h (f32) + cast copy
    return est


def _select_tiles(t8, hp, fp, cfg, cd_bytes, out_bytes, use_scratch,
                  tile_m_req, tile_f_req):
    budget = cfg["vmem_budget"]

    # tile_f candidates (tried largest first); all must divide the padded F dim.
    if tile_f_req is not None:
        assert fp % tile_f_req == 0 and tile_f_req % 128 == 0, \
            "tile_f must be a multiple of 128 dividing the padded intermediate dim"
        tf_cands = [tile_f_req]
    else:
        tiled = [c for c in (4096, 2048, 1024, 512, 256, 128)
                 if c < fp and c <= cfg["max_tile_f"] and fp % c == 0]
        pref = [c for c in tiled if c >= cfg["min_tile_f"]]
        tf_cands = pref or tiled
        resident_ok = 2 * hp * fp * cd_bytes <= cfg["resident_budget"]
        if resident_ok or not tf_cands:
            # Weight-resident fast path: one F step -> constant weight block index,
            # weights DMA'd once and kept resident across all token tiles.
            tf_cands = [fp] + tf_cands

    # Token tile: per-generation default, never larger than the token count.
    tm = cfg["tile_m"] if tile_m_req is None else tile_m_req
    tm = max(8, min(_round_up(tm, 8), t8))
    if cfg["cores"] >= 2 and t8 >= 16:
        # Keep >=2 token tiles so the "parallel" axis spans both v7x TensorCores.
        tm = min(tm, _round_up(_cdiv(t8, 2), 8))
    # Prefer a tile_m that divides the (8-rounded) token count: avoids a full
    # wrapper-side jnp.pad rewrite of the activation tensor.
    if t8 % tm != 0:
        for cand in range(tm - 8, max(8, tm // 2) - 1, -8):
            if t8 % cand == 0:
                tm = cand
                break

    # Shrink to fit the per-generation VMEM budget (tile_f first, then tile_m).
    tm_try = tm
    while True:
        for tf in tf_cands:
            if _est_vmem(tm_try, tf, hp, cd_bytes, out_bytes, use_scratch) <= budget:
                return tm_try, tf
        if tm_try <= 8:
            return 8, tf_cands[-1]
        tm_try = max(8, _round_up(tm_try // 2, 8))


def feed_forward_network(x, w1, b1, w2, b2, *, tile_m=None, tile_f=None,
                         compute_dtype=jnp.bfloat16):
    """x: (..., H) -> (..., H). Weights: w1 (H, 4H), b1 (4H,), w2 (4H, H), b2 (H,).

    compute_dtype: dtype of the matmul operands (accumulation is always f32).
    bf16 by default for MXU throughput and halved weight HBM traffic; pass
    jnp.float32 for exact fp32 parity with the PyTorch forward.
    """
    orig_shape = x.shape
    H = orig_shape[-1]
    F = w1.shape[1]
    out_dtype = x.dtype
    x2d = x.reshape(-1, H)
    T = x2d.shape[0]

    cfg = _chip_config()
    cd_bytes = jnp.dtype(compute_dtype).itemsize
    out_bytes = jnp.dtype(out_dtype).itemsize
    # f32 output: accumulate directly into the resident output tile (no scratch).
    use_scratch = jnp.dtype(out_dtype) != jnp.dtype(jnp.float32)

    # Pad lane dims to multiples of 128: lane-dense stores, full-width MXU K/N.
    # Zero padding keeps the math exact (padded rows/cols contribute 0).
    Hp = _round_up(H, 128)
    Fp = _round_up(F, 128)
    T8 = _round_up(max(T, 1), 8)

    tm, tf = _select_tiles(T8, Hp, Fp, cfg, cd_bytes, out_bytes, use_scratch,
                           tile_m, tile_f)
    num_m = _cdiv(T8, tm)
    num_f = Fp // tf
    T_pad = num_m * tm

    # Wrapper-side cast to the MXU compute dtype: halves weight/activation HBM
    # traffic and the double-buffered weight VMEM, and removes per-F-step casts.
    x_p = _pad2(x2d.astype(compute_dtype), T_pad, Hp)
    w1_p = _pad2(w1.astype(compute_dtype), Hp, Fp)
    w2_p = _pad2(w2.astype(compute_dtype), Fp, Hp)
    b1_p = _pad2(b1.reshape(1, F), 1, Fp)
    b2_p = _pad2(b2.reshape(1, H), 1, Hp)

    scratch_shapes = [pltpu.VMEM((tm, Hp), jnp.float32)] if use_scratch else []

    out = pl.pallas_call(
        _ffn_kernel,
        out_shape=jax.ShapeDtypeStruct((T_pad, Hp), out_dtype),
        grid_spec=pltpu.PrefetchScalarGridSpec(
            num_scalar_prefetch=0,
            grid=(num_m, num_f),                                   # F axis innermost
            in_specs=[
                pl.BlockSpec((tm, Hp), lambda i, k: (i, 0)),       # x tile
                pl.BlockSpec((Hp, tf), lambda i, k: (0, k)),       # w1 F-slice
                pl.BlockSpec((1, tf), lambda i, k: (0, k)),        # b1 F-slice
                pl.BlockSpec((tf, Hp), lambda i, k: (k, 0)),       # w2 F-slice
                pl.BlockSpec((1, Hp), lambda i, k: (0, 0)),        # b2 (invariant)
            ],
            out_specs=pl.BlockSpec((tm, Hp), lambda i, k: (i, 0)),
            scratch_shapes=scratch_shapes,
        ),
        compiler_params=pltpu.CompilerParams(
            dimension_semantics=("parallel", "arbitrary"),
            vmem_limit_bytes=int(cfg["vmem_budget"]),
        ),
    )(x_p, w1_p, b1_p, w2_p, b2_p)

    return out[:T, :H].reshape(orig_shape)


def _reference(x, w1, b1, w2, b2):
    h = x @ w1 + b1
    h = 0.5 * h * (1.0 + jax.lax.erf(h * _INV_SQRT2))
    return h @ w2 + b2


if __name__ == "__main__":
    key = jax.random.PRNGKey(0)
    batch, seq, hidden = 2, 8, 32
    ffn = hidden * 4

    k_x, k_w1, k_b1, k_w2, k_b2 = jax.random.split(key, 5)
    x = jax.random.normal(k_x, (batch, seq, hidden), dtype=jnp.float32)
    # Deterministic synthetic params; shapes follow nn.Linear(H, 4H) / nn.Linear(4H, H).
    w1 = jax.random.normal(k_w1, (hidden, ffn), dtype=jnp.float32) * (1.0 / math.sqrt(hidden))
    b1 = jax.random.normal(k_b1, (ffn,), dtype=jnp.float32) * 0.01
    w2 = jax.random.normal(k_w2, (ffn, hidden), dtype=jnp.float32) * (1.0 / math.sqrt(ffn))
    b2 = jax.random.normal(k_b2, (hidden,), dtype=jnp.float32) * 0.01

    ref = _reference(x, w1, b1, w2, b2)

    # fp32 matmul path: tight parity with the fp32 PyTorch forward.
    out_f32 = jax.block_until_ready(
        feed_forward_network(x, w1, b1, w2, b2, compute_dtype=jnp.float32))
    assert out_f32.shape == (batch, seq, hidden)
    assert jnp.allclose(out_f32, ref, atol=1e-4, rtol=1e-4), "fp32 path mismatch vs reference"

    # Default bf16-matmul path (MXU-friendly); relaxed tolerance vs the fp32 reference.
    out_bf16 = jax.block_until_ready(feed_forward_network(x, w1, b1, w2, b2))
    assert out_bf16.shape == (batch, seq, hidden)
    assert jnp.allclose(out_bf16, ref, atol=1e-1, rtol=1e-1), "bf16 path mismatch vs reference"

    # Exercise the multi-F-step reduction + scratch-accumulator path:
    # bf16 activations (non-f32 output), H=64 -> Fp=256 with forced tile_f=128 (num_f=2).
    hidden2 = 64
    ffn2 = hidden2 * 4
    x2 = jax.random.normal(k_x, (batch, seq, hidden2), dtype=jnp.bfloat16)
    w1b = jax.random.normal(k_w1, (hidden2, ffn2), dtype=jnp.float32) * (1.0 / math.sqrt(hidden2))
    b1b = jax.random.normal(k_b1, (ffn2,), dtype=jnp.float32) * 0.01
    w2b = jax.random.normal(k_w2, (ffn2, hidden2), dtype=jnp.float32) * (1.0 / math.sqrt(ffn2))
    b2b = jax.random.normal(k_b2, (hidden2,), dtype=jnp.float32) * 0.01
    ref2 = _reference(x2.astype(jnp.float32), w1b, b1b, w2b, b2b)
    out2 = jax.block_until_ready(
        feed_forward_network(x2, w1b, b1b, w2b, b2b, tile_m=8, tile_f=128,
                             compute_dtype=jnp.float32))
    assert out2.shape == (batch, seq, hidden2) and out2.dtype == jnp.bfloat16
    assert jnp.allclose(out2.astype(jnp.float32), ref2, atol=5e-2, rtol=5e-2), \
        "multi-F-step / scratch path mismatch vs reference"

    print("KERNEL_OK")
</pallas_src>

<mosaic_0001>
module attributes {stable_mosaic.version = 11 : i64} {
  func.func @_ffn_kernel(%arg0: i32, %arg1: i32, %arg2: memref<16x128xf32, #tpu.memory_space<vmem>>, %arg3: memref<128x128xf32, #tpu.memory_space<vmem>>, %arg4: memref<1x128xf32, #tpu.memory_space<vmem>>, %arg5: memref<128x128xf32, #tpu.memory_space<vmem>>, %arg6: memref<1x128xf32, #tpu.memory_space<vmem>>, %arg7: memref<16x128xf32, #tpu.memory_space<vmem>>) attributes {dimension_semantics = [#tpu.dimension_semantics<parallel>, #tpu.dimension_semantics<arbitrary>], iteration_bounds = array<i64: 1, 1>, scalar_prefetch = 0 : i64, scratch_operands = 0 : i64, tpu.core_type = #tpu.core_type<tc>, window_params = [{transform_indices = @transform_0, window_bounds = array<i64: 16, 128>}, {transform_indices = @transform_1, window_bounds = array<i64: 128, 128>}, {transform_indices = @transform_2, window_bounds = array<i64: 1, 128>}, {transform_indices = @transform_3, window_bounds = array<i64: 128, 128>}, {pipeline_mode = #tpu.pipeline_mode<synchronous>, transform_indices = @transform_4, window_bounds = array<i64: 1, 128>}, {transform_indices = @transform_5, window_bounds = array<i64: 16, 128>}]} {
    %c0_i32 = arith.constant 0 : i32
    %0 = arith.cmpi eq, %arg1, %c0_i32 : i32
    %1 = arith.extui %0 : i1 to i32
    %c0_i32_0 = arith.constant 0 : i32
    %2 = arith.cmpi ne, %1, %c0_i32_0 : i32
    scf.if %2 {
      %cst_18 = arith.constant 0.000000e+00 : f32
      %25 = vector.broadcast %cst_18 : f32 to vector<16x128xf32>
      %c0_19 = arith.constant 0 : index
      %c0_20 = arith.constant 0 : index
      %26 = vector.load %arg7[%c0_19, %c0_20] : memref<16x128xf32, #tpu.memory_space<vmem>>, vector<16x128xf32>
      tpu.vector_store %arg7[%c0_19, %c0_20], %25 {strides = array<i32>} : memref<16x128xf32, #tpu.memory_space<vmem>>, vector<16x128xf32>,
    } else {
    }
    %c0 = arith.constant 0 : index
    %c0_1 = arith.constant 0 : index
    %3 = vector.load %arg2[%c0, %c0_1] : memref<16x128xf32, #tpu.memory_space<vmem>>, vector<16x128xf32>
    %c0_2 = arith.constant 0 : index
    %c0_3 = arith.constant 0 : index
    %4 = vector.load %arg3[%c0_2, %c0_3] : memref<128x128xf32, #tpu.memory_space<vmem>>, vector<128x128xf32>
    %cst = arith.constant dense<0.000000e+00> : vector<16x128xf32>
    %5 = tpu.matmul %3, %4, %cst {dimension_numbers = #tpu.dot_dimension_numbers<[1], [0], [0], [1], [0, 0, 1, 1], [], []>} : vector<16x128xf32>, vector<128x128xf32>, vector<16x128xf32> -> vector<16x128xf32>
    %c0_4 = arith.constant 0 : index
    %c0_5 = arith.constant 0 : index
    %6 = vector.load %arg4[%c0_4, %c0_5] : memref<1x128xf32, #tpu.memory_space<vmem>>, vector<1x128xf32>
    %7 = vector.broadcast %6 : vector<1x128xf32> to vector<16x128xf32>
    %8 = arith.addf %5, %7 : vector<16x128xf32>
    %cst_6 = arith.constant 5.000000e-01 : f32
    %9 = vector.broadcast %cst_6 : f32 to vector<16x128xf32>
    %10 = arith.mulf %9, %8 : vector<16x128xf32>
    %cst_7 = arith.constant 0.707106769 : f32
    %11 = vector.broadcast %cst_7 : f32 to vector<16x128xf32>
    %12 = arith.mulf %8, %11 : vector<16x128xf32>
    %13 = math.erf %12 : vector<16x128xf32>
    %cst_8 = arith.constant 1.000000e+00 : f32
    %14 = vector.broadcast %cst_8 : f32 to vector<16x128xf32>
    %15 = arith.addf %14, %13 : vector<16x128xf32>
    %16 = arith.mulf %10, %15 : vector<16x128xf32>
    %c0_9 = arith.constant 0 : index
    %c0_10 = arith.constant 0 : index
    %17 = vector.load %arg7[%c0_9, %c0_10] : memref<16x128xf32, #tpu.memory_space<vmem>>, vector<16x128xf32>
    %c0_11 = arith.constant 0 : index
    %c0_12 = arith.constant 0 : index
    %18 = vector.load %arg5[%c0_11, %c0_12] : memref<128x128xf32, #tpu.memory_space<vmem>>, vector<128x128xf32>
    %cst_13 = arith.constant dense<0.000000e+00> : vector<16x128xf32>
    %19 = tpu.matmul %16, %18, %cst_13 {dimension_numbers = #tpu.dot_dimension_numbers<[1], [0], [0], [1], [0, 0, 1, 1], [], []>} : vector<16x128xf32>, vector<128x128xf32>, vector<16x128xf32> -> vector<16x128xf32>
    %20 = arith.addf %17, %19 : vector<16x128xf32>
    %c0_14 = arith.constant 0 : index
    %c0_15 = arith.constant 0 : index
    %21 = vector.load %arg7[%c0_14, %c0_15] : memref<16x128xf32, #tpu.memory_space<vmem>>, vector<16x128xf32>
    tpu.vector_store %arg7[%c0_14, %c0_15], %20 {strides = array<i32>} : memref<16x128xf32, #tpu.memory_space<vmem>>, vector<16x128xf32>,
    %c0_i32_16 = arith.constant 0 : i32
    %22 = arith.cmpi eq, %arg1, %c0_i32_16 : i32
    %23 = arith.extui %22 : i1 to i32
    %c0_i32_17 = arith.constant 0 : i32
    %24 = arith.cmpi ne, %23, %c0_i32_17 : i32
    scf.if %24 {
      %c0_18 = arith.constant 0 : index
      %c0_19 = arith.constant 0 : index
      %25 = vector.load %arg7[%c0_18, %c0_19] : memref<16x128xf32, #tpu.memory_space<vmem>>, vector<16x128xf32>
      %c0_20 = arith.constant 0 : index
      %c0_21 = arith.constant 0 : index
      %26 = vector.load %arg6[%c0_20, %c0_21] : memref<1x128xf32, #tpu.memory_space<vmem>>, vector<1x128xf32>
      %27 = vector.broadcast %26 : vector<1x128xf32> to vector<16x128xf32>
      %28 = arith.addf %25, %27 : vector<16x128xf32>
      %c0_22 = arith.constant 0 : index
      %c0_23 = arith.constant 0 : index
      %29 = vector.load %arg7[%c0_22, %c0_23] : memref<16x128xf32, #tpu.memory_space<vmem>>, vector<16x128xf32>
      tpu.vector_store %arg7[%c0_22, %c0_23], %28 {strides = array<i32>} : memref<16x128xf32, #tpu.memory_space<vmem>>, vector<16x128xf32>,
    } else {
    }
    return
  }
  func.func @transform_0(%arg0: i32, %arg1: i32) -> (i32, i32) {
    %c0_i32 = arith.constant 0 : i32
    %c0_i32_0 = arith.constant 0 : i32
    return %arg0, %c0_i32 : i32, i32
  }
  func.func @transform_1(%arg0: i32, %arg1: i32) -> (i32, i32) {
    %c0_i32 = arith.constant 0 : i32
    %c0_i32_0 = arith.constant 0 : i32
    return %c0_i32, %arg1 : i32, i32
  }
  func.func @transform_2(%arg0: i32, %arg1: i32) -> (i32, i32) {
    %c0_i32 = arith.constant 0 : i32
    %c0_i32_0 = arith.constant 0 : i32
    return %c0_i32, %arg1 : i32, i32
  }
  func.func @transform_3(%arg0: i32, %arg1: i32) -> (i32, i32) {
    %c0_i32 = arith.constant 0 : i32
    %c0_i32_0 = arith.constant 0 : i32
    return %arg1, %c0_i32 : i32, i32
  }
  func.func @transform_4(%arg0: i32, %arg1: i32) -> (i32, i32) {
    %c0_i32 = arith.constant 0 : i32
    %c0_i32_0 = arith.constant 0 : i32
    %c0_i32_1 = arith.constant 0 : i32
    return %c0_i32, %c0_i32_0 : i32, i32
  }
  func.func @transform_5(%arg0: i32, %arg1: i32) -> (i32, i32) {
    %c0_i32 = arith.constant 0 : i32
    %c0_i32_0 = arith.constant 0 : i32
    return %arg0, %c0_i32 : i32, i32
  }
}

</mosaic_0001>

<llo_original>
// kernel: tpu_custom_call.1
$region0: #{tpu_custom_call.1}
  #allocation0 [shape = 'u32[]', space=smem, size = 0x4, offset = 0x4, fixed_abs, tag = 'smem constant byte address 0x4 - core index']
  #allocation1 [shape = 'u32[144,128]{1,0:T(1,128)}', space=vmem, size = 0x12000, scoped, tag = 'internal scratch']
  %s0 = inlined_call_operand.hbm [shape: f32[16,128], index: 0, kind: input, shape index: {}]
  %s1 = inlined_call_operand.hbm [shape: f32[128,128], index: 1, kind: input, shape index: {}]
  %s2 = inlined_call_operand.hbm [shape: f32[1,128], index: 2, kind: input, shape index: {}]
  %s3 = inlined_call_operand.hbm [shape: f32[128,128], index: 3, kind: input, shape index: {}]
  %s4 = inlined_call_operand.hbm [shape: f32[1,128], index: 4, kind: input, shape index: {}]
  %s5 = inlined_call_operand.hbm [shape: f32[16,128], index: 5, kind: output, shape index: {}]
  %s6 = sld [smem:[#allocation0]]
  $region58: #{tpu_custom_call.1} parent=0
    _
  %s8 = ssub.s32 1, %s6
  %s9 = scalar_select 0, %s8, %s6
  $region1: #{tpu_custom_call.1} parent=0
    #allocation2 [shape = 'u8[8192]{0}', space=vmem, size = 0x2000, scoped, tag = 'input window, operand 0, single buffered']
    #allocation3 [shape = 's32[1]{0}', space=sflag, size = 0x4, scoped, tag = 'scoped memory for tpu_custom_call.1']
    #allocation4 [shape = 's32[1]{0}', space=sflag, size = 0x4, scoped, tag = 'scoped memory for tpu_custom_call.1']
    #allocation5 [shape = 'u8[65536]{0}', space=vmem, size = 0x10000, scoped, tag = 'input window, operand 1, single buffered']
    #allocation6 [shape = 's32[1]{0}', space=sflag, size = 0x4, scoped, tag = 'scoped memory for tpu_custom_call.1']
    #allocation7 [shape = 'u8[512]{0}', space=vmem, size = 0x400, scoped, tag = 'input window, operand 2, single buffered']
    #allocation8 [shape = 'u8[65536]{0}', space=vmem, size = 0x10000, scoped, tag = 'input window, operand 3, single buffered']
    #allocation9 [shape = 's32[1]{0}', space=sflag, size = 0x4, scoped, tag = 'scoped memory for tpu_custom_call.1']
    #allocation10 [shape = 'u8[512]{0}', space=vmem, size = 0x400, scoped, tag = 'input window, operand 4, single buffered']
    #allocation11 [shape = 'u8[8192]{0}', space=vmem, size = 0x2000, scoped, tag = 'output window, operand 0, single buffered']
    %10 = vsyncpa [#allocation3], 0
    %11 = vsyncpa [#allocation6], 0
    %12 = vsyncpa [#allocation9], 0
    %13 = vsyncpa [#allocation4], 0
    // Predicated region
    $region2: #{tpu_custom_call.1} parent=1 // pred_check
      _
    $region3: #{tpu_custom_call.1} parent=1 // pred_check_branch
      %15 = sbr.rel (0) target = $region5
    $region4: #{tpu_custom_call.1} parent=1 // pred_region
      %s17 = ssub.s32 256, 256
      %18 = vsyncadd [#allocation3], %s17
      %s19 = sshll.u32 [#allocation2], 4
      %s20 = int_to_ptr.vmem [resolvable:$true] %s19
      %25 = dma.hbm_to_vmem [thread:$0]  %s0, 256, %s20, [#allocation3], 128, 128, 8
    $region5: #{tpu_custom_call.1} parent=1 // pred_fallthru
      _
    // Predicated region
    $region6: #{tpu_custom_call.1} parent=1 // pred_check
      _
    $region7: #{tpu_custom_call.1} parent=1 // pred_check_branch
      %27 = sbr.rel (0) target = $region9
    $region8: #{tpu_custom_call.1} parent=1 // pred_region
      %s29 = ssub.s32 2048, 2048
      %30 = vsyncadd [#allocation6], %s29
      %s31 = sshll.u32 [#allocation5], 4
      %s32 = int_to_ptr.vmem [resolvable:$true] %s31
      %37 = dma.hbm_to_vmem [thread:$0]  %s1, 2048, %s32, [#allocation6], 128, 128, 8
    $region9: #{tpu_custom_call.1} parent=1 // pred_fallthru
      _
    // Predicated region
    $region10: #{tpu_custom_call.1} parent=1 // pred_check
      _
    $region11: #{tpu_custom_call.1} parent=1 // pred_check_branch
      %39 = sbr.rel (0) target = $region13
    $region12: #{tpu_custom_call.1} parent=1 // pred_region
      %s41 = ssub.s32 16, 16
      %42 = vsyncadd [#allocation6], %s41
      %s44 = sshll.u32 [#allocation7], 4
      %s45 = int_to_ptr.vmem [resolvable:$true] %s44
      %47 = dma.hbm_to_vmem [thread:$0]  %s2, 16, %s45, [#allocation6]
    $region13: #{tpu_custom_call.1} parent=1 // pred_fallthru
      _
    // Predicated region
    $region14: #{tpu_custom_call.1} parent=1 // pred_check
      _
    $region15: #{tpu_custom_call.1} parent=1 // pred_check_branch
      %49 = sbr.rel (0) target = $region17
    $region16: #{tpu_custom_call.1} parent=1 // pred_region
      %s51 = ssub.s32 2048, 2048
      %52 = vsyncadd [#allocation9], %s51
      %s53 = sshll.u32 [#allocation8], 4
      %s54 = int_to_ptr.vmem [resolvable:$true] %s53
      %59 = dma.hbm_to_vmem [thread:$0]  %s3, 2048, %s54, [#allocation9], 128, 128, 8
    $region17: #{tpu_custom_call.1} parent=1 // pred_fallthru
      _
    // Predicated region
    $region18: #{tpu_custom_call.1} parent=1 // pred_check
      _
    $region19: #{tpu_custom_call.1} parent=1 // pred_check_branch
      %61 = sbr.rel (0) target = $region21
    $region20: #{tpu_custom_call.1} parent=1 // pred_region
      %s63 = ssub.s32 16, 16
      %64 = vsyncadd [#allocation9], %s63
      %s66 = sshll.u32 [#allocation10], 4
      %s67 = int_to_ptr.vmem [resolvable:$true] %s66
      %69 = dma.hbm_to_vmem [thread:$0]  %s4, 16, %s67, [#allocation9]
    $region21: #{tpu_custom_call.1} parent=1 // pred_fallthru
      _
    // Predicated region
    $region22: #{tpu_custom_call.1} parent=1 // pred_check
      _
    $region23: #{tpu_custom_call.1} parent=1 // pred_check_branch
      %71 = sbr.rel (0) target = $region25
    $region24: #{tpu_custom_call.1} parent=1 // pred_region
      %72 = dma.done [#allocation3], 256
    $region25: #{tpu_custom_call.1} parent=1 // pred_fallthru
      _
    // Predicated region
    $region26: #{tpu_custom_call.1} parent=1 // pred_check
      _
    $region27: #{tpu_custom_call.1} parent=1 // pred_check_branch
      %74 = sbr.rel (0) target = $region29
    $region28: #{tpu_custom_call.1} parent=1 // pred_region
      %75 = dma.done [#allocation6], 2048
    $region29: #{tpu_custom_call.1} parent=1 // pred_fallthru
      _
    // Predicated region
    $region30: #{tpu_custom_call.1} parent=1 // pred_check
      _
    $region31: #{tpu_custom_call.1} parent=1 // pred_check_branch
      %77 = sbr.rel (0) target = $region33
    $region32: #{tpu_custom_call.1} parent=1 // pred_region
      %78 = dma.done [#allocation6], 16
    $region33: #{tpu_custom_call.1} parent=1 // pred_fallthru
      _
    // Predicated region
    $region34: #{tpu_custom_call.1} parent=1 // pred_check
      _
    $region35: #{tpu_custom_call.1} parent=1 // pred_check_branch
      %80 = sbr.rel (0) target = $region37
    $region36: #{tpu_custom_call.1} parent=1 // pred_region
      %81 = dma.done [#allocation9], 2048
    $region37: #{tpu_custom_call.1} parent=1 // pred_fallthru
      _
    // Predicated region
    $region38: #{tpu_custom_call.1} parent=1 // pred_check
      _
    $region39: #{tpu_custom_call.1} parent=1 // pred_check_branch
      %83 = sbr.rel (0) target = $region41
    $region40: #{tpu_custom_call.1} parent=1 // pred_region
      %84 = dma.done [#allocation9], 16
    $region41: #{tpu_custom_call.1} parent=1 // pred_fallthru
      _
    %p85 = scmp.eq.s32.totalorder 0, 0
    // Predicated region
    $region42: #{tpu_custom_call.1} parent=1 // pred_check
      %p86 = pneg %p85
    $region43: #{tpu_custom_call.1} parent=1 // pred_check_branch
      %88 = sbr.rel (%p86) target = $region45
    $region44: #{tpu_custom_call.1} parent=1 // pred_region
      %89 = vst [vmem:[#allocation11] sm:$0xff] 0.0
      %90 = vst [vmem:[#allocation11 + $0x8] sm:$0xff] 0.0
    $region45: #{tpu_custom_call.1} parent=1 // pred_fallthru
      _
    %v91 = vld [vmem:[#allocation2] sm:$0xff]
    %v92 = vld [vmem:[#allocation2 + $0x8] sm:$0xff]
    %v93 = vld [vmem:[#allocation5] sm:$0xff]
    %v94 = vld [vmem:[#allocation5 + $0x8] sm:$0xff]
    %v95 = vld [vmem:[#allocation5 + $0x10] sm:$0xff]
    %v96 = vld [vmem:[#allocation5 + $0x18] sm:$0xff]
    %v97 = vld [vmem:[#allocation5 + $0x20] sm:$0xff]
    %v98 = vld [vmem:[#allocation5 + $0x28] sm:$0xff]
    %v99 = vld [vmem:[#allocation5 + $0x30] sm:$0xff]
    %v100 = vld [vmem:[#allocation5 + $0x38] sm:$0xff]
    %v101 = vld [vmem:[#allocation5 + $0x40] sm:$0xff]
    %v102 = vld [vmem:[#allocation5 + $0x48] sm:$0xff]
    %v103 = vld [vmem:[#allocation5 + $0x50] sm:$0xff]
    %v104 = vld [vmem:[#allocation5 + $0x58] sm:$0xff]
    %v105 = vld [vmem:[#allocation5 + $0x60] sm:$0xff]
    %v106 = vld [vmem:[#allocation5 + $0x68] sm:$0xff]
    %v107 = vld [vmem:[#allocation5 + $0x70] sm:$0xff]
    %v108 = vld [vmem:[#allocation5 + $0x78] sm:$0xff]
    %v109 = vld [vmem:[#allocation7] sm:$0x1]
    %v111 = vlaneseq
    %v112 = vshrl.u32 %v111, 7
    %v113 = vsub.s32 0, %v112
    %v114 = vrot.slane %v109, %v113
    %116 = vmatprep.subr.mxu0 0.0
    %117 = vmatpush1.msra.mxu0 %v93
    %118 = vmatprep.subr.mxu0 0.0
    %119 = vmatpush1.msra.mxu0 %v94
    %120 = vmatprep.subr.mxu0 0.0
    %121 = vmatpush1.msra.mxu0 %v95
    %122 = vmatprep.subr.mxu0 0.0
    %123 = vmatpush1.msra.mxu0 %v96
    %124 = vmatprep.subr.mxu0 0.0
    %125 = vmatpush1.msra.mxu0 %v97
    %126 = vmatprep.subr.mxu0 0.0
    %127 = vmatpush1.msra.mxu0 %v98
    %128 = vmatprep.subr.mxu0 0.0
    %129 = vmatpush1.msra.mxu0 %v99
    %130 = vmatprep.subr.mxu0 0.0
    %131 = vmatpush1.msra.mxu0 %v100
    %132 = vmatprep.subr.mxu0 0.0
    %133 = vmatpush1.msra.mxu0 %v101
    %134 = vmatprep.subr.mxu0 0.0
    %135 = vmatpush1.msra.mxu0 %v102
    %136 = vmatprep.subr.mxu0 0.0
    %137 = vmatpush1.msra.mxu0 %v103
    %138 = vmatprep.subr.mxu0 0.0
    %139 = vmatpush1.msra.mxu0 %v104
    %140 = vmatprep.subr.mxu0 0.0
    %141 = vmatpush1.msra.mxu0 %v105
    %142 = vmatprep.subr.mxu0 0.0
    %143 = vmatpush1.msra.mxu0 %v106
    %144 = vmatprep.subr.mxu0 0.0
    %145 = vmatpush1.msra.mxu0 %v107
    %146 = vmatprep.subr.mxu0 0.0
    %147 = vmatpush1.msra.mxu0 %v108
    %148 = vmatprep.subr.mxu0 0.0
    %149 = vmatpush1.msra.mxu0 0.0
    %150 = vmatprep.subr.mxu0 0.0
    %151 = vmatpush1.msra.mxu0 0.0
    %152 = vmatprep.subr.mxu0 0.0
    %153 = vmatpush1.msra.mxu0 0.0
    %154 = vmatprep.subr.mxu0 0.0
    %155 = vmatpush1.msra.mxu0 0.0
    %156 = vmatprep.subr.mxu0 0.0
    %157 = vmatpush1.msra.mxu0 0.0
    %158 = vmatprep.subr.mxu0 0.0
    %159 = vmatpush1.msra.mxu0 0.0
    %160 = vmatprep.subr.mxu0 0.0
    %161 = vmatpush1.msra.mxu0 0.0
    %162 = vmatprep.subr.mxu0 0.0
    %163 = vmatpush1.msra.mxu0 0.0
    %164 = vmatprep.subr.mxu0 0.0
    %165 = vmatpush1.msra.mxu0 0.0
    %166 = vmatprep.subr.mxu0 0.0
    %167 = vmatpush1.msra.mxu0 0.0
    %168 = vmatprep.subr.mxu0 0.0
    %169 = vmatpush1.msra.mxu0 0.0
    %170 = vmatprep.subr.mxu0 0.0
    %171 = vmatpush1.msra.mxu0 0.0
    %172 = vmatprep.subr.mxu0 0.0
    %173 = vmatpush1.msra.mxu0 0.0
    %174 = vmatprep.subr.mxu0 0.0
    %175 = vmatpush1.msra.mxu0 0.0
    %176 = vmatprep.subr.mxu0 0.0
    %177 = vmatpush1.msra.mxu0 0.0
    %178 = vmatprep.subr.mxu0 0.0
    %179 = vmatpush1.msra.mxu0 0.0
    %180 = vmatprep.mubr.f32.mxu0 0.0
    %181 = vmatmul.mubr.f32.gmra.mrb[0].mxu0 %v91
    %v182 = vpop.f32.mrb[0].mxu0
    %v183 = vadd.f32 %v114, %v182
    %v184 = vpop.f32.mrb[0].mxu0
    %185 = vmatprep.mubr.f32.mxu0 0.0
    %186 = vmatmul.mubr.f32.gmra.mrb[0].mxu0 %v92
    %v187 = vpop.f32.mrb[0].mxu0
    %v188 = vadd.f32 %v114, %v187
    %v189 = vpop.f32.mrb[0].mxu0
    %190 = vdwg.mxu0
    %v191 = vmul.f32 %v183, 0.5
    %v192 = vmul.f32 %v188, 0.5
    %v193 = vmul.f32 %v183, 0.70710677
    %v194 = vmul.f32 %v188, 0.70710677
    %v195 = verf.f32.pop %v193
    %v196 = verf.f32.pop %v194
    %v197 = vadd.f32 %v195, 1.0
    %v198 = vadd.f32 %v196, 1.0
    %v199 = vmul.f32 %v191, %v197
    %v200 = vmul.f32 %v192, %v198
    %v201 = vld [vmem:[#allocation11] sm:$0xff]
    %v202 = vld [vmem:[#allocation11 + $0x8] sm:$0xff]
    %v203 = vld [vmem:[#allocation8] sm:$0xff]
    %v204 = vld [vmem:[#allocation8 + $0x8] sm:$0xff]
    %v205 = vld [vmem:[#allocation8 + $0x10] sm:$0xff]
    %v206 = vld [vmem:[#allocation8 + $0x18] sm:$0xff]
    %v207 = vld [vmem:[#allocation8 + $0x20] sm:$0xff]
    %v208 = vld [vmem:[#allocation8 + $0x28] sm:$0xff]
    %v209 = vld [vmem:[#allocation8 + $0x30] sm:$0xff]
    %v210 = vld [vmem:[#allocation8 + $0x38] sm:$0xff]
    %v211 = vld [vmem:[#allocation8 + $0x40] sm:$0xff]
    %v212 = vld [vmem:[#allocation8 + $0x48] sm:$0xff]
    %v213 = vld [vmem:[#allocation8 + $0x50] sm:$0xff]
    %v214 = vld [vmem:[#allocation8 + $0x58] sm:$0xff]
    %v215 = vld [vmem:[#allocation8 + $0x60] sm:$0xff]
    %v216 = vld [vmem:[#allocation8 + $0x68] sm:$0xff]
    %v217 = vld [vmem:[#allocation8 + $0x70] sm:$0xff]
    %v218 = vld [vmem:[#allocation8 + $0x78] sm:$0xff]
    %219 = vmatprep.subr.mxu0 0.0
    %220 = vmatpush1.msra.mxu0 %v203
    %221 = vmatprep.subr.mxu0 0.0
    %222 = vmatpush1.msra.mxu0 %v204
    %223 = vmatprep.subr.mxu0 0.0
    %224 = vmatpush1.msra.mxu0 %v205
    %225 = vmatprep.subr.mxu0 0.0
    %226 = vmatpush1.msra.mxu0 %v206
    %227 = vmatprep.subr.mxu0 0.0
    %228 = vmatpush1.msra.mxu0 %v207
    %229 = vmatprep.subr.mxu0 0.0
    %230 = vmatpush1.msra.mxu0 %v208
    %231 = vmatprep.subr.mxu0 0.0
    %232 = vmatpush1.msra.mxu0 %v209
    %233 = vmatprep.subr.mxu0 0.0
    %234 = vmatpush1.msra.mxu0 %v210
    %235 = vmatprep.subr.mxu0 0.0
    %236 = vmatpush1.msra.mxu0 %v211
    %237 = vmatprep.subr.mxu0 0.0
    %238 = vmatpush1.msra.mxu0 %v212
    %239 = vmatprep.subr.mxu0 0.0
    %240 = vmatpush1.msra.mxu0 %v213
    %241 = vmatprep.subr.mxu0 0.0
    %242 = vmatpush1.msra.mxu0 %v214
    %243 = vmatprep.subr.mxu0 0.0
    %244 = vmatpush1.msra.mxu0 %v215
    %245 = vmatprep.subr.mxu0 0.0
    %246 = vmatpush1.msra.mxu0 %v216
    %247 = vmatprep.subr.mxu0 0.0
    %248 = vmatpush1.msra.mxu0 %v217
    %249 = vmatprep.subr.mxu0 0.0
    %250 = vmatpush1.msra.mxu0 %v218
    %251 = vmatprep.subr.mxu0 0.0
    %252 = vmatpush1.msra.mxu0 0.0
    %253 = vmatprep.subr.mxu0 0.0
    %254 = vmatpush1.msra.mxu0 0.0
    %255 = vmatprep.subr.mxu0 0.0
    %256 = vmatpush1.msra.mxu0 0.0
    %257 = vmatprep.subr.mxu0 0.0
    %258 = vmatpush1.msra.mxu0 0.0
    %259 = vmatprep.subr.mxu0 0.0
    %260 = vmatpush1.msra.mxu0 0.0
    %261 = vmatprep.subr.mxu0 0.0
    %262 = vmatpush1.msra.mxu0 0.0
    %263 = vmatprep.subr.mxu0 0.0
    %264 = vmatpush1.msra.mxu0 0.0
    %265 = vmatprep.subr.mxu0 0.0
    %266 = vmatpush1.msra.mxu0 0.0
    %267 = vmatprep.subr.mxu0 0.0
    %268 = vmatpush1.msra.mxu0 0.0
    %269 = vmatprep.subr.mxu0 0.0
    %270 = vmatpush1.msra.mxu0 0.0
    %271 = vmatprep.subr.mxu0 0.0
    %272 = vmatpush1.msra.mxu0 0.0
    %273 = vmatprep.subr.mxu0 0.0
    %274 = vmatpush1.msra.mxu0 0.0
    %275 = vmatprep.subr.mxu0 0.0
    %276 = vmatpush1.msra.mxu0 0.0
    %277 = vmatprep.subr.mxu0 0.0
    %278 = vmatpush1.msra.mxu0 0.0
    %279 = vmatprep.subr.mxu0 0.0
    %280 = vmatpush1.msra.mxu0 0.0
    %281 = vmatprep.subr.mxu0 0.0
    %282 = vmatpush1.msra.mxu0 0.0
    %283 = vmatprep.mubr.f32.mxu0 0.0
    %284 = vmatmul.mubr.f32.gmra.mrb[0].mxu0 %v199
    %v285 = vpop.f32.mrb[0].mxu0
    %v286 = vadd.f32 0.0, %v285
    %v287 = vpop.f32.mrb[0].mxu0
    %288 = vmatprep.mubr.f32.mxu0 0.0
    %289 = vmatmul.mubr.f32.gmra.mrb[0].mxu0 %v200
    %v290 = vpop.f32.mrb[0].mxu0
    %v291 = vadd.f32 0.0, %v290
    %v292 = vpop.f32.mrb[0].mxu0
    %293 = vdwg.mxu0
    %v294 = vadd.f32 %v201, %v286
    %v295 = vadd.f32 %v202, %v291
    %296 = vst [vmem:[#allocation11] sm:$0xff] %v294
    %297 = vst [vmem:[#allocation11 + $0x8] sm:$0xff] %v295
    // Predicated region
    $region46: #{tpu_custom_call.1} parent=1 // pred_check
      %p298 = pneg %p85
    $region47: #{tpu_custom_call.1} parent=1 // pred_check_branch
      %300 = sbr.rel (%p298) target = $region49
    $region48: #{tpu_custom_call.1} parent=1 // pred_region
      %v301 = vld [vmem:[#allocation11] sm:$0xff]
      %v302 = vld [vmem:[#allocation11 + $0x8] sm:$0xff]
      %v303 = vld [vmem:[#allocation10] sm:$0x1]
      %v305 = vlaneseq
      %v306 = vshrl.u32 %v305, 7
      %v307 = vsub.s32 0, %v306
      %v308 = vrot.slane %v303, %v307
      %v310 = vadd.f32 %v301, %v308
      %v311 = vadd.f32 %v302, %v308
      %312 = vst [vmem:[#allocation11] sm:$0xff] %v310
      %313 = vst [vmem:[#allocation11 + $0x8] sm:$0xff] %v311
    $region49: #{tpu_custom_call.1} parent=1 // pred_fallthru
      _
    // Predicated region
    $region50: #{tpu_custom_call.1} parent=1 // pred_check
      _
    $region51: #{tpu_custom_call.1} parent=1 // pred_check_branch
      %315 = sbr.rel (0) target = $region53
    $region52: #{tpu_custom_call.1} parent=1 // pred_region
      %s317 = ssub.s32 256, 256
      %318 = vsyncadd [#allocation4], %s317
      %s319 = sshll.u32 [#allocation11], 4
      %s320 = int_to_ptr.vmem [resolvable:$true] %s319
      %325 = dma.vmem_to_hbm [thread:$0]  %s320, 256, %s5, [#allocation4], 128, 128, 8
    $region53: #{tpu_custom_call.1} parent=1 // pred_fallthru
      _
    // Predicated region
    $region54: #{tpu_custom_call.1} parent=1 // pred_check
      _
    $region55: #{tpu_custom_call.1} parent=1 // pred_check_branch
      %327 = sbr.rel (0) target = $region57
    $region56: #{tpu_custom_call.1} parent=1 // pred_region
      %328 = dma.done [#allocation4], 256
    $region57: #{tpu_custom_call.1} parent=1 // pred_fallthru
      _
    %329 = vsyncpa [#allocation3], 1
    %330 = vsyncpa [#allocation6], 1
    %331 = vsyncpa [#allocation9], 1
    %332 = vsyncpa [#allocation4], 1

</llo_original>
